<compile_context>
chip_gen: v7x
topology: tpu7x:2x2x1
jax: 0.10.0
libtpu: 0.0.40
codegen_flags: <defaults>
</compile_context>

<pallas_src>
import jax
import jax.numpy as jnp
from jax.experimental import pallas as pl
from jax.experimental.pallas import tpu as pltpu

INPUT_SIZE = 28
HIDDEN_SIZE = 128
NUM_CLASSES = 10


def make_rnn_kernel(T, Bp, H, keep_xw_in_vregs, unroll):
    """Returns (kernel, scratch_shapes) for the given static sizes."""

    if keep_xw_in_vregs:
        # Small T*Bp: XW lives entirely in vregs; serial loop fully unrolled
        # with static row slices (Bp is a multiple of 8, H == 128, so every
        # slice is tile-aligned).
        def kernel(x_ref, wih_ref, whh_ref, b_ref, wout_ref, bout_ref, o_ref):
            # Hoisted input projection: one (T*Bp, D) x (D, H) MXU matmul
            # (bf16 operands, f32 accumulation) + folded bias.
            xw = jnp.dot(x_ref[...], wih_ref[...],
                         preferred_element_type=jnp.float32) + b_ref[...]
            whh = whh_ref[...]

            # Peeled t = 0 step: h0 == 0  ->  h1 = tanh(x_0 @ W_ih + b).
            h = jnp.tanh(xw[0:Bp])

            # Serial recurrence: per step only (Bp,H)x(H,H) matmul + tanh.
            # h stays f32; only the MXU operand is cast to bf16.
            for t in range(1, T):
                h = jnp.tanh(
                    xw[t * Bp:(t + 1) * Bp]
                    + jnp.dot(h.astype(whh.dtype), whh,
                              preferred_element_type=jnp.float32))

            # Fused classifier head (lane-padded to 128 -> unmasked stores).
            o_ref[...] = (jnp.dot(h.astype(wout_ref.dtype), wout_ref[...],
                                  preferred_element_type=jnp.float32)
                          + bout_ref[...]).astype(o_ref.dtype)

        return kernel, []

    # Large T*Bp: keep XW in a VMEM scratch and loop with fori_loop.
    def kernel(x_ref, wih_ref, whh_ref, b_ref, wout_ref, bout_ref, o_ref,
               xw_scr):
        xw_scr[...] = jnp.dot(x_ref[...], wih_ref[...],
                              preferred_element_type=jnp.float32) + b_ref[...]
        whh = whh_ref[...]

        # Peeled t = 0 step.
        h1 = jnp.tanh(xw_scr[pl.ds(0, Bp), :])

        def step(t, h):
            off = pl.multiple_of(t * Bp, Bp)
            return jnp.tanh(
                xw_scr[pl.ds(off, Bp), :]
                + jnp.dot(h.astype(whh.dtype), whh,
                          preferred_element_type=jnp.float32))

        h = jax.lax.fori_loop(1, T, step, h1, unroll=unroll)

        o_ref[...] = (jnp.dot(h.astype(wout_ref.dtype), wout_ref[...],
                              preferred_element_type=jnp.float32)
                      + bout_ref[...]).astype(o_ref.dtype)

    return kernel, [pltpu.VMEM((T * Bp, H), jnp.float32)]


def rnn_forward(x, w_ih, w_hh, b_ih, b_hh, w_out, b_out,
                *, mxu_dtype=jnp.bfloat16):
    """x: (B, T, D_in) float32 (batch_first). Returns (B, NUM_CLASSES) float32.

    Weights are stored as (in, out), i.e. transposed vs. PyTorch's (out, in),
    so the kernel computes x_t @ W_ih + h @ W_hh + b — identical math.
    MXU operands are cast to `mxu_dtype` (bf16); accumulation and the
    tanh/bias path stay float32.
    """
    B, T, D = x.shape
    H = w_ih.shape[1]
    C = w_out.shape[1]

    B_pad = ((B + 7) // 8) * 8           # sublane-align batch
    C_pad = ((C + 127) // 128) * 128     # lane-dense classifier output

    # Layout plumbing (cheap XLA ops, outside the serial kernel):
    # time-major x, zero-pad batch, flatten to (T*Bp, D) so the kernel needs
    # no reshapes, fold RNN biases, pad classifier to 128 lanes, bf16-cast
    # the MXU operands.
    x_tm = jnp.transpose(x, (1, 0, 2))                          # (T, B, D)
    x_tm = jnp.pad(x_tm, ((0, 0), (0, B_pad - B), (0, 0)))      # (T, Bp, D)
    x2d = x_tm.reshape(T * B_pad, D).astype(mxu_dtype)          # (T*Bp, D)

    w_ih_c = w_ih.astype(mxu_dtype)                             # (D, H)
    w_hh_c = w_hh.astype(mxu_dtype)                             # (H, H)
    b_rnn = (jnp.reshape(b_ih, (-1,)) + jnp.reshape(b_hh, (-1,))
             ).reshape(1, H).astype(jnp.float32)                # (1, H)
    w_out_p = jnp.pad(w_out, ((0, 0), (0, C_pad - C))).astype(mxu_dtype)
    b_out_p = jnp.pad(jnp.reshape(b_out, (1, C)),
                      ((0, 0), (0, C_pad - C))).astype(jnp.float32)

    # Keep XW in vregs while it is small (<= ~half the 256 KiB vreg file);
    # beyond that go via a VMEM scratch.  Unroll only short serial loops.
    keep_xw_in_vregs = (T * B_pad * H * 4) <= 128 * 1024
    unroll = T <= 16

    kernel, scratch = make_rnn_kernel(T, B_pad, H, keep_xw_in_vregs, unroll)

    out_padded = pl.pallas_call(
        kernel,
        out_shape=jax.ShapeDtypeStruct((B_pad, C_pad), jnp.float32),
        grid_spec=pltpu.PrefetchScalarGridSpec(
            num_scalar_prefetch=0,
            grid=(1,),                                   # single invocation
            in_specs=[
                pl.BlockSpec((T * B_pad, D), lambda i: (0, 0)),   # x (flat)
                pl.BlockSpec((D, H), lambda i: (0, 0)),           # W_ih
                pl.BlockSpec((H, H), lambda i: (0, 0)),           # W_hh
                pl.BlockSpec((1, H), lambda i: (0, 0)),           # b_ih+b_hh
                pl.BlockSpec((H, C_pad), lambda i: (0, 0)),       # W_out
                pl.BlockSpec((1, C_pad), lambda i: (0, 0)),       # b_out
            ],
            out_specs=pl.BlockSpec((B_pad, C_pad), lambda i: (0, 0)),
            scratch_shapes=scratch,
        ),
        compiler_params=pltpu.CompilerParams(
            dimension_semantics=("arbitrary",)),
    )(x2d, w_ih_c, w_hh_c, b_rnn, w_out_p, b_out_p)

    return out_padded[:B, :C]


def rnn_reference(x, w_ih, w_hh, b_ih, b_hh, w_out, b_out):
    """Pure-JAX f32 reference (same math as torch.nn.RNN + Linear)."""
    B, T, D = x.shape
    H = w_ih.shape[1]

    def step(h, x_t):
        h_new = jnp.tanh(x_t @ w_ih + h @ w_hh + b_ih[0] + b_hh[0])
        return h_new, None

    h0 = jnp.zeros((B, H), jnp.float32)
    h_last, _ = jax.lax.scan(step, h0, jnp.swapaxes(x, 0, 1))
    return h_last @ w_out + b_out[0]


if __name__ == "__main__":
    key = jax.random.PRNGKey(0)
    B, T = 4, 8   # small batch / sequence; input_size is fixed at 28 by the module

    ks = jax.random.split(key, 8)
    bound_rnn = 1.0 / jnp.sqrt(HIDDEN_SIZE)
    bound_out = 1.0 / jnp.sqrt(HIDDEN_SIZE)

    x = jax.random.normal(ks[0], (B, T, INPUT_SIZE), jnp.float32)

    # Parameters stored as (in, out) == PyTorch's (out, in) transposed.
    w_ih = jax.random.uniform(ks[1], (INPUT_SIZE, HIDDEN_SIZE), jnp.float32,
                              -bound_rnn, bound_rnn)
    w_hh = jax.random.uniform(ks[2], (HIDDEN_SIZE, HIDDEN_SIZE), jnp.float32,
                              -bound_rnn, bound_rnn)
    b_ih = jax.random.uniform(ks[3], (1, HIDDEN_SIZE), jnp.float32,
                              -bound_rnn, bound_rnn)
    b_hh = jax.random.uniform(ks[4], (1, HIDDEN_SIZE), jnp.float32,
                              -bound_rnn, bound_rnn)
    w_out = jax.random.uniform(ks[5], (HIDDEN_SIZE, NUM_CLASSES), jnp.float32,
                               -bound_out, bound_out)
    b_out = jax.random.uniform(ks[6], (1, NUM_CLASSES), jnp.float32,
                               -bound_out, bound_out)

    out = rnn_forward(x, w_ih, w_hh, b_ih, b_hh, w_out, b_out)
    out = jax.block_until_ready(out)

    ref = rnn_reference(x, w_ih, w_hh, b_ih, b_hh, w_out, b_out)
    assert out.shape == (B, NUM_CLASSES)
    # Tolerance loosened vs. the f32 reference because MXU operands are bf16.
    assert jnp.allclose(out, ref, atol=3e-2, rtol=3e-2), "mismatch vs reference"

    print("KERNEL_OK")
</pallas_src>

<mosaic_0001>
module attributes {stable_mosaic.version = 11 : i64} {
  func.func @kernel(%arg0: i32, %arg1: memref<64x28xbf16, #tpu.memory_space<vmem>>, %arg2: memref<28x128xbf16, #tpu.memory_space<vmem>>, %arg3: memref<128x128xbf16, #tpu.memory_space<vmem>>, %arg4: memref<1x128xf32, #tpu.memory_space<vmem>>, %arg5: memref<128x128xbf16, #tpu.memory_space<vmem>>, %arg6: memref<1x128xf32, #tpu.memory_space<vmem>>, %arg7: memref<8x128xf32, #tpu.memory_space<vmem>>) attributes {dimension_semantics = [#tpu.dimension_semantics<arbitrary>], iteration_bounds = array<i64: 1>, scalar_prefetch = 0 : i64, scratch_operands = 0 : i64, tpu.core_type = #tpu.core_type<tc>, window_params = [{pipeline_mode = #tpu.pipeline_mode<synchronous>, transform_indices = @transform_0, window_bounds = array<i64: 64, 28>}, {pipeline_mode = #tpu.pipeline_mode<synchronous>, transform_indices = @transform_1, window_bounds = array<i64: 28, 128>}, {pipeline_mode = #tpu.pipeline_mode<synchronous>, transform_indices = @transform_2, window_bounds = array<i64: 128, 128>}, {pipeline_mode = #tpu.pipeline_mode<synchronous>, transform_indices = @transform_3, window_bounds = array<i64: 1, 128>}, {pipeline_mode = #tpu.pipeline_mode<synchronous>, transform_indices = @transform_4, window_bounds = array<i64: 128, 128>}, {pipeline_mode = #tpu.pipeline_mode<synchronous>, transform_indices = @transform_5, window_bounds = array<i64: 1, 128>}, {pipeline_mode = #tpu.pipeline_mode<synchronous>, transform_indices = @transform_6, window_bounds = array<i64: 8, 128>}]} {
    %c0 = arith.constant 0 : index
    %c0_0 = arith.constant 0 : index
    %0 = vector.load %arg1[%c0, %c0_0] : memref<64x28xbf16, #tpu.memory_space<vmem>>, vector<64x28xbf16>
    %c0_1 = arith.constant 0 : index
    %c0_2 = arith.constant 0 : index
    %1 = vector.load %arg2[%c0_1, %c0_2] : memref<28x128xbf16, #tpu.memory_space<vmem>>, vector<28x128xbf16>
    %cst = arith.constant dense<0.000000e+00> : vector<64x128xf32>
    %2 = tpu.matmul %0, %1, %cst {dimension_numbers = #tpu.dot_dimension_numbers<[1], [0], [0], [1], [0, 0, 1, 1], [], []>} : vector<64x28xbf16>, vector<28x128xbf16>, vector<64x128xf32> -> vector<64x128xf32>
    %c0_3 = arith.constant 0 : index
    %c0_4 = arith.constant 0 : index
    %3 = vector.load %arg4[%c0_3, %c0_4] : memref<1x128xf32, #tpu.memory_space<vmem>>, vector<1x128xf32>
    %4 = vector.broadcast %3 : vector<1x128xf32> to vector<64x128xf32>
    %5 = arith.addf %2, %4 : vector<64x128xf32>
    %c0_5 = arith.constant 0 : index
    %c0_6 = arith.constant 0 : index
    %6 = vector.load %arg3[%c0_5, %c0_6] : memref<128x128xbf16, #tpu.memory_space<vmem>>, vector<128x128xbf16>
    %7 = vector.extract_strided_slice %5 {offsets = [0, 0], sizes = [8, 128], strides = [1, 1]} : vector<64x128xf32> to vector<8x128xf32>
    %8 = math.tanh %7 : vector<8x128xf32>
    %9 = vector.extract_strided_slice %5 {offsets = [8, 0], sizes = [8, 128], strides = [1, 1]} : vector<64x128xf32> to vector<8x128xf32>
    %10 = arith.truncf %8 : vector<8x128xf32> to vector<8x128xbf16>
    %cst_7 = arith.constant dense<0.000000e+00> : vector<8x128xf32>
    %11 = tpu.matmul %10, %6, %cst_7 {dimension_numbers = #tpu.dot_dimension_numbers<[1], [0], [0], [1], [0, 0, 1, 1], [], []>} : vector<8x128xbf16>, vector<128x128xbf16>, vector<8x128xf32> -> vector<8x128xf32>
    %12 = arith.addf %9, %11 : vector<8x128xf32>
    %13 = math.tanh %12 : vector<8x128xf32>
    %14 = vector.extract_strided_slice %5 {offsets = [16, 0], sizes = [8, 128], strides = [1, 1]} : vector<64x128xf32> to vector<8x128xf32>
    %15 = arith.truncf %13 : vector<8x128xf32> to vector<8x128xbf16>
    %cst_8 = arith.constant dense<0.000000e+00> : vector<8x128xf32>
    %16 = tpu.matmul %15, %6, %cst_8 {dimension_numbers = #tpu.dot_dimension_numbers<[1], [0], [0], [1], [0, 0, 1, 1], [], []>} : vector<8x128xbf16>, vector<128x128xbf16>, vector<8x128xf32> -> vector<8x128xf32>
    %17 = arith.addf %14, %16 : vector<8x128xf32>
    %18 = math.tanh %17 : vector<8x128xf32>
    %19 = vector.extract_strided_slice %5 {offsets = [24, 0], sizes = [8, 128], strides = [1, 1]} : vector<64x128xf32> to vector<8x128xf32>
    %20 = arith.truncf %18 : vector<8x128xf32> to vector<8x128xbf16>
    %cst_9 = arith.constant dense<0.000000e+00> : vector<8x128xf32>
    %21 = tpu.matmul %20, %6, %cst_9 {dimension_numbers = #tpu.dot_dimension_numbers<[1], [0], [0], [1], [0, 0, 1, 1], [], []>} : vector<8x128xbf16>, vector<128x128xbf16>, vector<8x128xf32> -> vector<8x128xf32>
    %22 = arith.addf %19, %21 : vector<8x128xf32>
    %23 = math.tanh %22 : vector<8x128xf32>
    %24 = vector.extract_strided_slice %5 {offsets = [32, 0], sizes = [8, 128], strides = [1, 1]} : vector<64x128xf32> to vector<8x128xf32>
    %25 = arith.truncf %23 : vector<8x128xf32> to vector<8x128xbf16>
    %cst_10 = arith.constant dense<0.000000e+00> : vector<8x128xf32>
    %26 = tpu.matmul %25, %6, %cst_10 {dimension_numbers = #tpu.dot_dimension_numbers<[1], [0], [0], [1], [0, 0, 1, 1], [], []>} : vector<8x128xbf16>, vector<128x128xbf16>, vector<8x128xf32> -> vector<8x128xf32>
    %27 = arith.addf %24, %26 : vector<8x128xf32>
    %28 = math.tanh %27 : vector<8x128xf32>
    %29 = vector.extract_strided_slice %5 {offsets = [40, 0], sizes = [8, 128], strides = [1, 1]} : vector<64x128xf32> to vector<8x128xf32>
    %30 = arith.truncf %28 : vector<8x128xf32> to vector<8x128xbf16>
    %cst_11 = arith.constant dense<0.000000e+00> : vector<8x128xf32>
    %31 = tpu.matmul %30, %6, %cst_11 {dimension_numbers = #tpu.dot_dimension_numbers<[1], [0], [0], [1], [0, 0, 1, 1], [], []>} : vector<8x128xbf16>, vector<128x128xbf16>, vector<8x128xf32> -> vector<8x128xf32>
    %32 = arith.addf %29, %31 : vector<8x128xf32>
    %33 = math.tanh %32 : vector<8x128xf32>
    %34 = vector.extract_strided_slice %5 {offsets = [48, 0], sizes = [8, 128], strides = [1, 1]} : vector<64x128xf32> to vector<8x128xf32>
    %35 = arith.truncf %33 : vector<8x128xf32> to vector<8x128xbf16>
    %cst_12 = arith.constant dense<0.000000e+00> : vector<8x128xf32>
    %36 = tpu.matmul %35, %6, %cst_12 {dimension_numbers = #tpu.dot_dimension_numbers<[1], [0], [0], [1], [0, 0, 1, 1], [], []>} : vector<8x128xbf16>, vector<128x128xbf16>, vector<8x128xf32> -> vector<8x128xf32>
    %37 = arith.addf %34, %36 : vector<8x128xf32>
    %38 = math.tanh %37 : vector<8x128xf32>
    %39 = vector.extract_strided_slice %5 {offsets = [56, 0], sizes = [8, 128], strides = [1, 1]} : vector<64x128xf32> to vector<8x128xf32>
    %40 = arith.truncf %38 : vector<8x128xf32> to vector<8x128xbf16>
    %cst_13 = arith.constant dense<0.000000e+00> : vector<8x128xf32>
    %41 = tpu.matmul %40, %6, %cst_13 {dimension_numbers = #tpu.dot_dimension_numbers<[1], [0], [0], [1], [0, 0, 1, 1], [], []>} : vector<8x128xbf16>, vector<128x128xbf16>, vector<8x128xf32> -> vector<8x128xf32>
    %42 = arith.addf %39, %41 : vector<8x128xf32>
    %43 = math.tanh %42 : vector<8x128xf32>
    %44 = arith.truncf %43 : vector<8x128xf32> to vector<8x128xbf16>
    %c0_14 = arith.constant 0 : index
    %c0_15 = arith.constant 0 : index
    %45 = vector.load %arg5[%c0_14, %c0_15] : memref<128x128xbf16, #tpu.memory_space<vmem>>, vector<128x128xbf16>
    %cst_16 = arith.constant dense<0.000000e+00> : vector<8x128xf32>
    %46 = tpu.matmul %44, %45, %cst_16 {dimension_numbers = #tpu.dot_dimension_numbers<[1], [0], [0], [1], [0, 0, 1, 1], [], []>} : vector<8x128xbf16>, vector<128x128xbf16>, vector<8x128xf32> -> vector<8x128xf32>
    %c0_17 = arith.constant 0 : index
    %c0_18 = arith.constant 0 : index
    %47 = vector.load %arg6[%c0_17, %c0_18] : memref<1x128xf32, #tpu.memory_space<vmem>>, vector<1x128xf32>
    %48 = vector.broadcast %47 : vector<1x128xf32> to vector<8x128xf32>
    %49 = arith.addf %46, %48 : vector<8x128xf32>
    %c0_19 = arith.constant 0 : index
    %c0_20 = arith.constant 0 : index
    %50 = vector.load %arg7[%c0_19, %c0_20] : memref<8x128xf32, #tpu.memory_space<vmem>>, vector<8x128xf32>
    tpu.vector_store %arg7[%c0_19, %c0_20], %49 {strides = array<i32>} : memref<8x128xf32, #tpu.memory_space<vmem>>, vector<8x128xf32>,
    return
  }
  func.func @transform_0(%arg0: i32) -> (i32, i32) {
    %c0_i32 = arith.constant 0 : i32
    %c0_i32_0 = arith.constant 0 : i32
    %c0_i32_1 = arith.constant 0 : i32
    return %c0_i32, %c0_i32_0 : i32, i32
  }
  func.func @transform_1(%arg0: i32) -> (i32, i32) {
    %c0_i32 = arith.constant 0 : i32
    %c0_i32_0 = arith.constant 0 : i32
    %c0_i32_1 = arith.constant 0 : i32
    return %c0_i32, %c0_i32_0 : i32, i32
  }
  func.func @transform_2(%arg0: i32) -> (i32, i32) {
    %c0_i32 = arith.constant 0 : i32
    %c0_i32_0 = arith.constant 0 : i32
    %c0_i32_1 = arith.constant 0 : i32
    return %c0_i32, %c0_i32_0 : i32, i32
  }
  func.func @transform_3(%arg0: i32) -> (i32, i32) {
    %c0_i32 = arith.constant 0 : i32
    %c0_i32_0 = arith.constant 0 : i32
    %c0_i32_1 = arith.constant 0 : i32
    return %c0_i32, %c0_i32_0 : i32, i32
  }
  func.func @transform_4(%arg0: i32) -> (i32, i32) {
    %c0_i32 = arith.constant 0 : i32
    %c0_i32_0 = arith.constant 0 : i32
    %c0_i32_1 = arith.constant 0 : i32
    return %c0_i32, %c0_i32_0 : i32, i32
  }
  func.func @transform_5(%arg0: i32) -> (i32, i32) {
    %c0_i32 = arith.constant 0 : i32
    %c0_i32_0 = arith.constant 0 : i32
    %c0_i32_1 = arith.constant 0 : i32
    return %c0_i32, %c0_i32_0 : i32, i32
  }
  func.func @transform_6(%arg0: i32) -> (i32, i32) {
    %c0_i32 = arith.constant 0 : i32
    %c0_i32_0 = arith.constant 0 : i32
    %c0_i32_1 = arith.constant 0 : i32
    return %c0_i32, %c0_i32_0 : i32, i32
  }
}

</mosaic_0001>

<llo_original>
// kernel: tpu_custom_call.1
$region0: #{tpu_custom_call.1}
  #allocation0 [shape = 'u32[]', space=smem, size = 0x4, offset = 0x4, fixed_abs, tag = 'smem constant byte address 0x4 - core index']
  #allocation1 [shape = 'u32[144,128]{1,0:T(1,128)}', space=vmem, size = 0x12000, scoped, tag = 'internal scratch']
  %s0 = inlined_call_operand.vmem [shape: bf16[64,28], index: 0, kind: input, shape index: {}]
  %s1 = inlined_call_operand.vmem [shape: bf16[28,128], index: 1, kind: input, shape index: {}]
  %s2 = inlined_call_operand.hbm [shape: bf16[128,128], index: 2, kind: input, shape index: {}]
  %s3 = inlined_call_operand.vmem [shape: f32[1,128], index: 3, kind: input, shape index: {}]
  %s4 = inlined_call_operand.hbm [shape: bf16[128,128], index: 4, kind: input, shape index: {}]
  %s5 = inlined_call_operand.vmem [shape: f32[1,128], index: 5, kind: input, shape index: {}]
  %s6 = inlined_call_operand.hbm [shape: f32[8,128], index: 6, kind: output, shape index: {}]
  %s7 = sld [smem:[#allocation0]]
  $region42: #{tpu_custom_call.1} parent=0
    _
  %s9 = ssub.s32 1, %s7
  %s10 = scalar_select 0, %s9, %s7
  $region1: #{tpu_custom_call.1} parent=0
    #allocation2 [shape = 'u8[32768]{0}', space=vmem, size = 0x8000, scoped, tag = 'input window, operand 2, single buffered']
    #allocation3 [shape = 's32[1]{0}', space=sflag, size = 0x4, scoped, tag = 'scoped memory for tpu_custom_call.1']
    #allocation4 [shape = 's32[1]{0}', space=sflag, size = 0x4, scoped, tag = 'scoped memory for tpu_custom_call.1']
    #allocation5 [shape = 'u8[32768]{0}', space=vmem, size = 0x8000, scoped, tag = 'input window, operand 4, single buffered']
    #allocation6 [shape = 's32[1]{0}', space=sflag, size = 0x4, scoped, tag = 'scoped memory for tpu_custom_call.1']
    #allocation7 [shape = 'u8[4096]{0}', space=vmem, size = 0x1000, scoped, tag = 'output window, operand 0, single buffered']
    %11 = vsyncpa [#allocation3], 0
    %12 = vsyncpa [#allocation6], 0
    %13 = vsyncpa [#allocation4], 0
    // Predicated region
    $region2: #{tpu_custom_call.1} parent=1 // pred_check
      _
    $region3: #{tpu_custom_call.1} parent=1 // pred_check_branch
      %15 = sbr.rel (0) target = $region5
    $region4: #{tpu_custom_call.1} parent=1 // pred_region
      _
    $region5: #{tpu_custom_call.1} parent=1 // pred_fallthru
      _
    // Predicated region
    $region6: #{tpu_custom_call.1} parent=1 // pred_check
      _
    $region7: #{tpu_custom_call.1} parent=1 // pred_check_branch
      %17 = sbr.rel (0) target = $region9
    $region8: #{tpu_custom_call.1} parent=1 // pred_region
      _
    $region9: #{tpu_custom_call.1} parent=1 // pred_fallthru
      _
    // Predicated region
    $region10: #{tpu_custom_call.1} parent=1 // pred_check
      _
    $region11: #{tpu_custom_call.1} parent=1 // pred_check_branch
      %19 = sbr.rel (0) target = $region13
    $region12: #{tpu_custom_call.1} parent=1 // pred_region
      %s21 = ssub.s32 1024, 1024
      %22 = vsyncadd [#allocation3], %s21
      %s23 = sshll.u32 [#allocation2], 4
      %s24 = int_to_ptr.vmem [resolvable:$true] %s23
      %29 = dma.hbm_to_vmem [thread:$0]  %s2, 1024, %s24, [#allocation3], 64, 64, 4
    $region13: #{tpu_custom_call.1} parent=1 // pred_fallthru
      _
    // Predicated region
    $region14: #{tpu_custom_call.1} parent=1 // pred_check
      _
    $region15: #{tpu_custom_call.1} parent=1 // pred_check_branch
      %31 = sbr.rel (0) target = $region17
    $region16: #{tpu_custom_call.1} parent=1 // pred_region
      _
    $region17: #{tpu_custom_call.1} parent=1 // pred_fallthru
      _
    // Predicated region
    $region18: #{tpu_custom_call.1} parent=1 // pred_check
      _
    $region19: #{tpu_custom_call.1} parent=1 // pred_check_branch
      %33 = sbr.rel (0) target = $region21
    $region20: #{tpu_custom_call.1} parent=1 // pred_region
      %s35 = ssub.s32 1024, 1024
      %36 = vsyncadd [#allocation6], %s35
      %s37 = sshll.u32 [#allocation5], 4
      %s38 = int_to_ptr.vmem [resolvable:$true] %s37
      %43 = dma.hbm_to_vmem [thread:$0]  %s4, 1024, %s38, [#allocation6], 64, 64, 4
    $region21: #{tpu_custom_call.1} parent=1 // pred_fallthru
      _
    // Predicated region
    $region22: #{tpu_custom_call.1} parent=1 // pred_check
      _
    $region23: #{tpu_custom_call.1} parent=1 // pred_check_branch
      %45 = sbr.rel (0) target = $region25
    $region24: #{tpu_custom_call.1} parent=1 // pred_region
      _
    $region25: #{tpu_custom_call.1} parent=1 // pred_fallthru
      _
    // Predicated region
    $region26: #{tpu_custom_call.1} parent=1 // pred_check
      _
    $region27: #{tpu_custom_call.1} parent=1 // pred_check_branch
      %47 = sbr.rel (0) target = $region29
    $region28: #{tpu_custom_call.1} parent=1 // pred_region
      %48 = dma.done [#allocation3], 1024
    $region29: #{tpu_custom_call.1} parent=1 // pred_fallthru
      _
    // Predicated region
    $region30: #{tpu_custom_call.1} parent=1 // pred_check
      _
    $region31: #{tpu_custom_call.1} parent=1 // pred_check_branch
      %50 = sbr.rel (0) target = $region33
    $region32: #{tpu_custom_call.1} parent=1 // pred_region
      %51 = dma.done [#allocation6], 1024
    $region33: #{tpu_custom_call.1} parent=1 // pred_fallthru
      _
    %v53 = vld [vmem:[%s0] sm:$0xf]
    %v54 = vld [vmem:[%s0 + $0x4] sm:$0xf]
    %v55 = vld [vmem:[%s0 + $0x8] sm:$0xf]
    %v56 = vld [vmem:[%s0 + $0xc] sm:$0xf]
    %v57 = vld [vmem:[%s0 + $0x10] sm:$0xf]
    %v58 = vld [vmem:[%s0 + $0x14] sm:$0xf]
    %v59 = vld [vmem:[%s0 + $0x18] sm:$0xf]
    %v60 = vld [vmem:[%s0 + $0x1c] sm:$0xf]
    %v61 = vld [vmem:[%s1] sm:$0xf]
    %v62 = vld [vmem:[%s1 + $0x4] sm:$0xf]
    %v63 = vld [vmem:[%s1 + $0x8] sm:$0xf]
    %v64 = vld [vmem:[%s1 + $0xc] sm:$0x3]
    %v65 = vld [vmem:[%s3] sm:$0x1]
    %v67 = vlaneseq
    %v68 = vshrl.u32 %v67, 7
    %v69 = vsub.s32 0, %v68
    %v70 = vrot.slane %v65, %v69
    %v80 = vunpack.c.l.b16 %v53
    %v81 = vunpack.c.l.b16 %v54
    %v82 = vunpack.c.l.b16 %v55
    %v83 = vunpack.c.l.b16 %v56
    %v84 = vunpack.c.l.b16 %v57
    %v85 = vunpack.c.l.b16 %v58
    %v86 = vunpack.c.l.b16 %v59
    %v87 = vunpack.c.l.b16 %v60
    %v88 = vpack.c.b16 %v81, %v80
    %v89 = vpack.c.b16 %v83, %v82
    %v90 = vpack.c.b16 %v85, %v84
    %v91 = vpack.c.b16 %v87, %v86
    %v96 = vunpack.c.l.b16 %v61
    %v97 = vunpack.c.l.b16 %v62
    %v98 = vunpack.c.l.b16 %v63
    %v99 = vunpack.c.l.b16 %v64
    %v100 = vpack.c.b16 %v97, %v96
    %v101 = vpack.c.b16 %v99, %v98
    %vm103 = vcmask 228352
    %v105 = vsel %vm103, %v88, 0
    %v108 = vsel %vm103, %v89, 0
    %v111 = vsel %vm103, %v90, 0
    %v114 = vsel %vm103, %v91, 0
    %vm116 = vcmask 1045504
    %v118 = vsel %vm116, %v101, 0
    %120 = vmatprep.subr.bf16.mxu0 0
    %121 = vmatpush1.bf16.msra.mxu0 %v100
    %122 = vmatprep.subr.bf16.mxu0 0
    %123 = vmatpush1.bf16.msra.mxu0 %v118
    %124 = vmatprep.subr.bf16.mxu0 0
    %125 = vmatpush1.bf16.msra.mxu0 0
    %126 = vmatprep.subr.bf16.mxu0 0
    %127 = vmatpush1.bf16.msra.mxu0 0
    %128 = vmatprep.subr.bf16.mxu0 0
    %129 = vmatpush1.bf16.msra.mxu0 0
    %130 = vmatprep.subr.bf16.mxu0 0
    %131 = vmatpush1.bf16.msra.mxu0 0
    %132 = vmatprep.subr.bf16.mxu0 0
    %133 = vmatpush1.bf16.msra.mxu0 0
    %134 = vmatprep.subr.bf16.mxu0 0
    %135 = vmatpush1.bf16.msra.mxu0 0
    %136 = vmatprep.subr.bf16.mxu0 0
    %137 = vmatpush1.bf16.msra.mxu0 0
    %138 = vmatprep.subr.bf16.mxu0 0
    %139 = vmatpush1.bf16.msra.mxu0 0
    %140 = vmatprep.subr.bf16.mxu0 0
    %141 = vmatpush1.bf16.msra.mxu0 0
    %142 = vmatprep.subr.bf16.mxu0 0
    %143 = vmatpush1.bf16.msra.mxu0 0
    %144 = vmatprep.subr.bf16.mxu0 0
    %145 = vmatpush1.bf16.msra.mxu0 0
    %146 = vmatprep.subr.bf16.mxu0 0
    %147 = vmatpush1.bf16.msra.mxu0 0
    %148 = vmatprep.subr.bf16.mxu0 0
    %149 = vmatpush1.bf16.msra.mxu0 0
    %150 = vmatprep.subr.bf16.mxu0 0
    %151 = vmatpush1.bf16.msra.mxu0 0
    %152 = vmatprep.mubr.bf16.mxu0 0
    %153 = vmatmul.mubr.bf16.gmra.mrb[0].mxu0 %v105
    %v154 = vpop.f32.mrb[0].mxu0
    %v155 = vadd.f32 %v70, %v154
    %v156 = vpop.f32.mrb[0].mxu0
    %v157 = vpop.f32.mrb[0].mxu0
    %v158 = vadd.f32 %v70, %v157
    %v159 = vpop.f32.mrb[0].mxu0
    %160 = vmatprep.mubr.bf16.mxu0 0
    %161 = vmatmul.mubr.bf16.gmra.mrb[0].mxu0 %v108
    %v162 = vpop.f32.mrb[0].mxu0
    %v163 = vadd.f32 %v70, %v162
    %v164 = vpop.f32.mrb[0].mxu0
    %v165 = vpop.f32.mrb[0].mxu0
    %v166 = vadd.f32 %v70, %v165
    %v167 = vpop.f32.mrb[0].mxu0
    %168 = vmatprep.mubr.bf16.mxu0 0
    %169 = vmatmul.mubr.bf16.gmra.mrb[0].mxu0 %v111
    %v170 = vpop.f32.mrb[0].mxu0
    %v171 = vadd.f32 %v70, %v170
    %v172 = vpop.f32.mrb[0].mxu0
    %v173 = vpop.f32.mrb[0].mxu0
    %v174 = vadd.f32 %v70, %v173
    %v175 = vpop.f32.mrb[0].mxu0
    %176 = vmatprep.mubr.bf16.mxu0 0
    %177 = vmatmul.mubr.bf16.gmra.mrb[0].mxu0 %v114
    %v178 = vpop.f32.mrb[0].mxu0
    %v179 = vadd.f32 %v70, %v178
    %v180 = vpop.f32.mrb[0].mxu0
    %v181 = vpop.f32.mrb[0].mxu0
    %v182 = vadd.f32 %v70, %v181
    %v183 = vpop.f32.mrb[0].mxu0
    %184 = vdwg.mxu0
    %v185 = vld [vmem:[#allocation2] sm:$0xf]
    %v186 = vld [vmem:[#allocation2 + $0x4] sm:$0xf]
    %v187 = vld [vmem:[#allocation2 + $0x8] sm:$0xf]
    %v188 = vld [vmem:[#allocation2 + $0xc] sm:$0xf]
    %v189 = vld [vmem:[#allocation2 + $0x10] sm:$0xf]
    %v190 = vld [vmem:[#allocation2 + $0x14] sm:$0xf]
    %v191 = vld [vmem:[#allocation2 + $0x18] sm:$0xf]
    %v192 = vld [vmem:[#allocation2 + $0x1c] sm:$0xf]
    %v193 = vld [vmem:[#allocation2 + $0x20] sm:$0xf]
    %v194 = vld [vmem:[#allocation2 + $0x24] sm:$0xf]
    %v195 = vld [vmem:[#allocation2 + $0x28] sm:$0xf]
    %v196 = vld [vmem:[#allocation2 + $0x2c] sm:$0xf]
    %v197 = vld [vmem:[#allocation2 + $0x30] sm:$0xf]
    %v198 = vld [vmem:[#allocation2 + $0x34] sm:$0xf]
    %v199 = vld [vmem:[#allocation2 + $0x38] sm:$0xf]
    %v200 = vld [vmem:[#allocation2 + $0x3c] sm:$0xf]
    %v201 = vtanh.pop %v155
    %v202 = vpack.c.bf16 %v201, %v201
    %v219 = vunpack.c.l.b16 %v185
    %v220 = vunpack.c.l.b16 %v186
    %v221 = vunpack.c.l.b16 %v187
    %v222 = vunpack.c.l.b16 %v188
    %v223 = vunpack.c.l.b16 %v189
    %v224 = vunpack.c.l.b16 %v190
    %v225 = vunpack.c.l.b16 %v191
    %v226 = vunpack.c.l.b16 %v192
    %v227 = vunpack.c.l.b16 %v193
    %v228 = vunpack.c.l.b16 %v194
    %v229 = vunpack.c.l.b16 %v195
    %v230 = vunpack.c.l.b16 %v196
    %v231 = vunpack.c.l.b16 %v197
    %v232 = vunpack.c.l.b16 %v198
    %v233 = vunpack.c.l.b16 %v199
    %v234 = vunpack.c.l.b16 %v200
    %v235 = vpack.c.b16 %v220, %v219
    %v236 = vpack.c.b16 %v222, %v221
    %v237 = vpack.c.b16 %v224, %v223
    %v238 = vpack.c.b16 %v226, %v225
    %v239 = vpack.c.b16 %v228, %v227
    %v240 = vpack.c.b16 %v230, %v229
    %v241 = vpack.c.b16 %v232, %v231
    %v242 = vpack.c.b16 %v234, %v233
    %251 = vmatprep.subr.bf16.mxu0 0
    %252 = vmatpush1.bf16.msra.mxu0 %v235
    %253 = vmatprep.subr.bf16.mxu0 0
    %254 = vmatpush1.bf16.msra.mxu0 %v236
    %255 = vmatprep.subr.bf16.mxu0 0
    %256 = vmatpush1.bf16.msra.mxu0 %v237
    %257 = vmatprep.subr.bf16.mxu0 0
    %258 = vmatpush1.bf16.msra.mxu0 %v238
    %259 = vmatprep.subr.bf16.mxu0 0
    %260 = vmatpush1.bf16.msra.mxu0 %v239
    %261 = vmatprep.subr.bf16.mxu0 0
    %262 = vmatpush1.bf16.msra.mxu0 %v240
    %263 = vmatprep.subr.bf16.mxu0 0
    %264 = vmatpush1.bf16.msra.mxu0 %v241
    %265 = vmatprep.subr.bf16.mxu0 0
    %266 = vmatpush1.bf16.msra.mxu0 %v242
    %267 = vmatprep.subr.bf16.mxu0 0
    %268 = vmatpush1.bf16.msra.mxu0 0
    %269 = vmatprep.subr.bf16.mxu0 0
    %270 = vmatpush1.bf16.msra.mxu0 0
    %271 = vmatprep.subr.bf16.mxu0 0
    %272 = vmatpush1.bf16.msra.mxu0 0
    %273 = vmatprep.subr.bf16.mxu0 0
    %274 = vmatpush1.bf16.msra.mxu0 0
    %275 = vmatprep.subr.bf16.mxu0 0
    %276 = vmatpush1.bf16.msra.mxu0 0
    %277 = vmatprep.subr.bf16.mxu0 0
    %278 = vmatpush1.bf16.msra.mxu0 0
    %279 = vmatprep.subr.bf16.mxu0 0
    %280 = vmatpush1.bf16.msra.mxu0 0
    %281 = vmatprep.subr.bf16.mxu0 0
    %282 = vmatpush1.bf16.msra.mxu0 0
    %283 = vmatprep.mubr.bf16.mxu0 0
    %284 = vmatmul.mubr.bf16.gmra.mrb[0].mxu0 %v202
    %v285 = vpop.f32.mrb[0].mxu0
    %v286 = vadd.f32 0.0, %v285
    %v287 = vpop.f32.mrb[0].mxu0
    %v288 = vpop.f32.mrb[0].mxu0
    %v289 = vpop.f32.mrb[0].mxu0
    %290 = vdwg.mxu0
    %v291 = vadd.f32 %v158, %v286
    %v292 = vtanh.pop %v291
    %v293 = vpack.c.bf16 %v292, %v292
    %294 = vmatprep.subr.bf16.mxu0 0
    %295 = vmatpush1.bf16.msra.mxu0 %v235
    %296 = vmatprep.subr.bf16.mxu0 0
    %297 = vmatpush1.bf16.msra.mxu0 %v236
    %298 = vmatprep.subr.bf16.mxu0 0
    %299 = vmatpush1.bf16.msra.mxu0 %v237
    %300 = vmatprep.subr.bf16.mxu0 0
    %301 = vmatpush1.bf16.msra.mxu0 %v238
    %302 = vmatprep.subr.bf16.mxu0 0
    %303 = vmatpush1.bf16.msra.mxu0 %v239
    %304 = vmatprep.subr.bf16.mxu0 0
    %305 = vmatpush1.bf16.msra.mxu0 %v240
    %306 = vmatprep.subr.bf16.mxu0 0
    %307 = vmatpush1.bf16.msra.mxu0 %v241
    %308 = vmatprep.subr.bf16.mxu0 0
    %309 = vmatpush1.bf16.msra.mxu0 %v242
    %310 = vmatprep.subr.bf16.mxu0 0
    %311 = vmatpush1.bf16.msra.mxu0 0
    %312 = vmatprep.subr.bf16.mxu0 0
    %313 = vmatpush1.bf16.msra.mxu0 0
    %314 = vmatprep.subr.bf16.mxu0 0
    %315 = vmatpush1.bf16.msra.mxu0 0
    %316 = vmatprep.subr.bf16.mxu0 0
    %317 = vmatpush1.bf16.msra.mxu0 0
    %318 = vmatprep.subr.bf16.mxu0 0
    %319 = vmatpush1.bf16.msra.mxu0 0
    %320 = vmatprep.subr.bf16.mxu0 0
    %321 = vmatpush1.bf16.msra.mxu0 0
    %322 = vmatprep.subr.bf16.mxu0 0
    %323 = vmatpush1.bf16.msra.mxu0 0
    %324 = vmatprep.subr.bf16.mxu0 0
    %325 = vmatpush1.bf16.msra.mxu0 0
    %326 = vmatprep.mubr.bf16.mxu0 0
    %327 = vmatmul.mubr.bf16.gmra.mrb[0].mxu0 %v293
    %v328 = vpop.f32.mrb[0].mxu0
    %v329 = vadd.f32 0.0, %v328
    %v330 = vpop.f32.mrb[0].mxu0
    %v331 = vpop.f32.mrb[0].mxu0
    %v332 = vpop.f32.mrb[0].mxu0
    %333 = vdwg.mxu0
    %v334 = vadd.f32 %v163, %v329
    %v335 = vtanh.pop %v334
    %v336 = vpack.c.bf16 %v335, %v335
    %337 = vmatprep.subr.bf16.mxu0 0
    %338 = vmatpush1.bf16.msra.mxu0 %v235
    %339 = vmatprep.subr.bf16.mxu0 0
    %340 = vmatpush1.bf16.msra.mxu0 %v236
    %341 = vmatprep.subr.bf16.mxu0 0
    %342 = vmatpush1.bf16.msra.mxu0 %v237
    %343 = vmatprep.subr.bf16.mxu0 0
    %344 = vmatpush1.bf16.msra.mxu0 %v238
    %345 = vmatprep.subr.bf16.mxu0 0
    %346 = vmatpush1.bf16.msra.mxu0 %v239
    %347 = vmatprep.subr.bf16.mxu0 0
    %348 = vmatpush1.bf16.msra.mxu0 %v240
    %349 = vmatprep.subr.bf16.mxu0 0
    %350 = vmatpush1.bf16.msra.mxu0 %v241
    %351 = vmatprep.subr.bf16.mxu0 0
    %352 = vmatpush1.bf16.msra.mxu0 %v242
    %353 = vmatprep.subr.bf16.mxu0 0
    %354 = vmatpush1.bf16.msra.mxu0 0
    %355 = vmatprep.subr.bf16.mxu0 0
    %356 = vmatpush1.bf16.msra.mxu0 0
    %357 = vmatprep.subr.bf16.mxu0 0
    %358 = vmatpush1.bf16.msra.mxu0 0
    %359 = vmatprep.subr.bf16.mxu0 0
    %360 = vmatpush1.bf16.msra.mxu0 0
    %361 = vmatprep.subr.bf16.mxu0 0
    %362 = vmatpush1.bf16.msra.mxu0 0
    %363 = vmatprep.subr.bf16.mxu0 0
    %364 = vmatpush1.bf16.msra.mxu0 0
    %365 = vmatprep.subr.bf16.mxu0 0
    %366 = vmatpush1.bf16.msra.mxu0 0
    %367 = vmatprep.subr.bf16.mxu0 0
    %368 = vmatpush1.bf16.msra.mxu0 0
    %369 = vmatprep.mubr.bf16.mxu0 0
    %370 = vmatmul.mubr.bf16.gmra.mrb[0].mxu0 %v336
    %v371 = vpop.f32.mrb[0].mxu0
    %v372 = vadd.f32 0.0, %v371
    %v373 = vpop.f32.mrb[0].mxu0
    %v374 = vpop.f32.mrb[0].mxu0
    %v375 = vpop.f32.mrb[0].mxu0
    %376 = vdwg.mxu0
    %v377 = vadd.f32 %v166, %v372
    %v378 = vtanh.pop %v377
    %v379 = vpack.c.bf16 %v378, %v378
    %380 = vmatprep.subr.bf16.mxu0 0
    %381 = vmatpush1.bf16.msra.mxu0 %v235
    %382 = vmatprep.subr.bf16.mxu0 0
    %383 = vmatpush1.bf16.msra.mxu0 %v236
    %384 = vmatprep.subr.bf16.mxu0 0
    %385 = vmatpush1.bf16.msra.mxu0 %v237
    %386 = vmatprep.subr.bf16.mxu0 0
    %387 = vmatpush1.bf16.msra.mxu0 %v238
    %388 = vmatprep.subr.bf16.mxu0 0
    %389 = vmatpush1.bf16.msra.mxu0 %v239
    %390 = vmatprep.subr.bf16.mxu0 0
    %391 = vmatpush1.bf16.msra.mxu0 %v240
    %392 = vmatprep.subr.bf16.mxu0 0
    %393 = vmatpush1.bf16.msra.mxu0 %v241
    %394 = vmatprep.subr.bf16.mxu0 0
    %395 = vmatpush1.bf16.msra.mxu0 %v242
    %396 = vmatprep.subr.bf16.mxu0 0
    %397 = vmatpush1.bf16.msra.mxu0 0
    %398 = vmatprep.subr.bf16.mxu0 0
    %399 = vmatpush1.bf16.msra.mxu0 0
    %400 = vmatprep.subr.bf16.mxu0 0
    %401 = vmatpush1.bf16.msra.mxu0 0
    %402 = vmatprep.subr.bf16.mxu0 0
    %403 = vmatpush1.bf16.msra.mxu0 0
    %404 = vmatprep.subr.bf16.mxu0 0
    %405 = vmatpush1.bf16.msra.mxu0 0
    %406 = vmatprep.subr.bf16.mxu0 0
    %407 = vmatpush1.bf16.msra.mxu0 0
    %408 = vmatprep.subr.bf16.mxu0 0
    %409 = vmatpush1.bf16.msra.mxu0 0
    %410 = vmatprep.subr.bf16.mxu0 0
    %411 = vmatpush1.bf16.msra.mxu0 0
    %412 = vmatprep.mubr.bf16.mxu0 0
    %413 = vmatmul.mubr.bf16.gmra.mrb[0].mxu0 %v379
    %v414 = vpop.f32.mrb[0].mxu0
    %v415 = vadd.f32 0.0, %v414
    %v416 = vpop.f32.mrb[0].mxu0
    %v417 = vpop.f32.mrb[0].mxu0
    %v418 = vpop.f32.mrb[0].mxu0
    %419 = vdwg.mxu0
    %v420 = vadd.f32 %v171, %v415
    %v421 = vtanh.pop %v420
    %v422 = vpack.c.bf16 %v421, %v421
    %423 = vmatprep.subr.bf16.mxu0 0
    %424 = vmatpush1.bf16.msra.mxu0 %v235
    %425 = vmatprep.subr.bf16.mxu0 0
    %426 = vmatpush1.bf16.msra.mxu0 %v236
    %427 = vmatprep.subr.bf16.mxu0 0
    %428 = vmatpush1.bf16.msra.mxu0 %v237
    %429 = vmatprep.subr.bf16.mxu0 0
    %430 = vmatpush1.bf16.msra.mxu0 %v238
    %431 = vmatprep.subr.bf16.mxu0 0
    %432 = vmatpush1.bf16.msra.mxu0 %v239
    %433 = vmatprep.subr.bf16.mxu0 0
    %434 = vmatpush1.bf16.msra.mxu0 %v240
    %435 = vmatprep.subr.bf16.mxu0 0
    %436 = vmatpush1.bf16.msra.mxu0 %v241
    %437 = vmatprep.subr.bf16.mxu0 0
    %438 = vmatpush1.bf16.msra.mxu0 %v242
    %439 = vmatprep.subr.bf16.mxu0 0
    %440 = vmatpush1.bf16.msra.mxu0 0
    %441 = vmatprep.subr.bf16.mxu0 0
    %442 = vmatpush1.bf16.msra.mxu0 0
    %443 = vmatprep.subr.bf16.mxu0 0
    %444 = vmatpush1.bf16.msra.mxu0 0
    %445 = vmatprep.subr.bf16.mxu0 0
    %446 = vmatpush1.bf16.msra.mxu0 0
    %447 = vmatprep.subr.bf16.mxu0 0
    %448 = vmatpush1.bf16.msra.mxu0 0
    %449 = vmatprep.subr.bf16.mxu0 0
    %450 = vmatpush1.bf16.msra.mxu0 0
    %451 = vmatprep.subr.bf16.mxu0 0
    %452 = vmatpush1.bf16.msra.mxu0 0
    %453 = vmatprep.subr.bf16.mxu0 0
    %454 = vmatpush1.bf16.msra.mxu0 0
    %455 = vmatprep.mubr.bf16.mxu0 0
    %456 = vmatmul.mubr.bf16.gmra.mrb[0].mxu0 %v422
    %v457 = vpop.f32.mrb[0].mxu0
    %v458 = vadd.f32 0.0, %v457
    %v459 = vpop.f32.mrb[0].mxu0
    %v460 = vpop.f32.mrb[0].mxu0
    %v461 = vpop.f32.mrb[0].mxu0
    %462 = vdwg.mxu0
    %v463 = vadd.f32 %v174, %v458
    %v464 = vtanh.pop %v463
    %v465 = vpack.c.bf16 %v464, %v464
    %466 = vmatprep.subr.bf16.mxu0 0
    %467 = vmatpush1.bf16.msra.mxu0 %v235
    %468 = vmatprep.subr.bf16.mxu0 0
    %469 = vmatpush1.bf16.msra.mxu0 %v236
    %470 = vmatprep.subr.bf16.mxu0 0
    %471 = vmatpush1.bf16.msra.mxu0 %v237
    %472 = vmatprep.subr.bf16.mxu0 0
    %473 = vmatpush1.bf16.msra.mxu0 %v238
    %474 = vmatprep.subr.bf16.mxu0 0
    %475 = vmatpush1.bf16.msra.mxu0 %v239
    %476 = vmatprep.subr.bf16.mxu0 0
    %477 = vmatpush1.bf16.msra.mxu0 %v240
    %478 = vmatprep.subr.bf16.mxu0 0
    %479 = vmatpush1.bf16.msra.mxu0 %v241
    %480 = vmatprep.subr.bf16.mxu0 0
    %481 = vmatpush1.bf16.msra.mxu0 %v242
    %482 = vmatprep.subr.bf16.mxu0 0
    %483 = vmatpush1.bf16.msra.mxu0 0
    %484 = vmatprep.subr.bf16.mxu0 0
    %485 = vmatpush1.bf16.msra.mxu0 0
    %486 = vmatprep.subr.bf16.mxu0 0
    %487 = vmatpush1.bf16.msra.mxu0 0
    %488 = vmatprep.subr.bf16.mxu0 0
    %489 = vmatpush1.bf16.msra.mxu0 0
    %490 = vmatprep.subr.bf16.mxu0 0
    %491 = vmatpush1.bf16.msra.mxu0 0
    %492 = vmatprep.subr.bf16.mxu0 0
    %493 = vmatpush1.bf16.msra.mxu0 0
    %494 = vmatprep.subr.bf16.mxu0 0
    %495 = vmatpush1.bf16.msra.mxu0 0
    %496 = vmatprep.subr.bf16.mxu0 0
    %497 = vmatpush1.bf16.msra.mxu0 0
    %498 = vmatprep.mubr.bf16.mxu0 0
    %499 = vmatmul.mubr.bf16.gmra.mrb[0].mxu0 %v465
    %v500 = vpop.f32.mrb[0].mxu0
    %v501 = vadd.f32 0.0, %v500
    %v502 = vpop.f32.mrb[0].mxu0
    %v503 = vpop.f32.mrb[0].mxu0
    %v504 = vpop.f32.mrb[0].mxu0
    %505 = vdwg.mxu0
    %v506 = vadd.f32 %v179, %v501
    %v507 = vtanh.pop %v506
    %v508 = vpack.c.bf16 %v507, %v507
    %509 = vmatprep.subr.bf16.mxu0 0
    %510 = vmatpush1.bf16.msra.mxu0 %v235
    %511 = vmatprep.subr.bf16.mxu0 0
    %512 = vmatpush1.bf16.msra.mxu0 %v236
    %513 = vmatprep.subr.bf16.mxu0 0
    %514 = vmatpush1.bf16.msra.mxu0 %v237
    %515 = vmatprep.subr.bf16.mxu0 0
    %516 = vmatpush1.bf16.msra.mxu0 %v238
    %517 = vmatprep.subr.bf16.mxu0 0
    %518 = vmatpush1.bf16.msra.mxu0 %v239
    %519 = vmatprep.subr.bf16.mxu0 0
    %520 = vmatpush1.bf16.msra.mxu0 %v240
    %521 = vmatprep.subr.bf16.mxu0 0
    %522 = vmatpush1.bf16.msra.mxu0 %v241
    %523 = vmatprep.subr.bf16.mxu0 0
    %524 = vmatpush1.bf16.msra.mxu0 %v242
    %525 = vmatprep.subr.bf16.mxu0 0
    %526 = vmatpush1.bf16.msra.mxu0 0
    %527 = vmatprep.subr.bf16.mxu0 0
    %528 = vmatpush1.bf16.msra.mxu0 0
    %529 = vmatprep.subr.bf16.mxu0 0
    %530 = vmatpush1.bf16.msra.mxu0 0
    %531 = vmatprep.subr.bf16.mxu0 0
    %532 = vmatpush1.bf16.msra.mxu0 0
    %533 = vmatprep.subr.bf16.mxu0 0
    %534 = vmatpush1.bf16.msra.mxu0 0
    %535 = vmatprep.subr.bf16.mxu0 0
    %536 = vmatpush1.bf16.msra.mxu0 0
    %537 = vmatprep.subr.bf16.mxu0 0
    %538 = vmatpush1.bf16.msra.mxu0 0
    %539 = vmatprep.subr.bf16.mxu0 0
    %540 = vmatpush1.bf16.msra.mxu0 0
    %541 = vmatprep.mubr.bf16.mxu0 0
    %542 = vmatmul.mubr.bf16.gmra.mrb[0].mxu0 %v508
    %v543 = vpop.f32.mrb[0].mxu0
    %v544 = vadd.f32 0.0, %v543
    %v545 = vpop.f32.mrb[0].mxu0
    %v546 = vpop.f32.mrb[0].mxu0
    %v547 = vpop.f32.mrb[0].mxu0
    %548 = vdwg.mxu0
    %v549 = vadd.f32 %v182, %v544
    %v550 = vtanh.pop %v549
    %v551 = vpack.c.bf16 %v550, %v550
    %v552 = vld [vmem:[#allocation5] sm:$0xf]
    %v553 = vld [vmem:[#allocation5 + $0x4] sm:$0xf]
    %v554 = vld [vmem:[#allocation5 + $0x8] sm:$0xf]
    %v555 = vld [vmem:[#allocation5 + $0xc] sm:$0xf]
    %v556 = vld [vmem:[#allocation5 + $0x10] sm:$0xf]
    %v557 = vld [vmem:[#allocation5 + $0x14] sm:$0xf]
    %v558 = vld [vmem:[#allocation5 + $0x18] sm:$0xf]
    %v559 = vld [vmem:[#allocation5 + $0x1c] sm:$0xf]
    %v560 = vld [vmem:[#allocation5 + $0x20] sm:$0xf]
    %v561 = vld [vmem:[#allocation5 + $0x24] sm:$0xf]
    %v562 = vld [vmem:[#allocation5 + $0x28] sm:$0xf]
    %v563 = vld [vmem:[#allocation5 + $0x2c] sm:$0xf]
    %v564 = vld [vmem:[#allocation5 + $0x30] sm:$0xf]
    %v565 = vld [vmem:[#allocation5 + $0x34] sm:$0xf]
    %v566 = vld [vmem:[#allocation5 + $0x38] sm:$0xf]
    %v567 = vld [vmem:[#allocation5 + $0x3c] sm:$0xf]
    %v568 = vld [vmem:[%s5] sm:$0x1]
    %v570 = vlaneseq
    %v571 = vshrl.u32 %v570, 7
    %v572 = vsub.s32 0, %v571
    %v573 = vrot.slane %v568, %v572
    %v591 = vunpack.c.l.b16 %v552
    %v592 = vunpack.c.l.b16 %v553
    %v593 = vunpack.c.l.b16 %v554
    %v594 = vunpack.c.l.b16 %v555
    %v595 = vunpack.c.l.b16 %v556
    %v596 = vunpack.c.l.b16 %v557
    %v597 = vunpack.c.l.b16 %v558
    %v598 = vunpack.c.l.b16 %v559
    %v599 = vunpack.c.l.b16 %v560
    %v600 = vunpack.c.l.b16 %v561
    %v601 = vunpack.c.l.b16 %v562
    %v602 = vunpack.c.l.b16 %v563
    %v603 = vunpack.c.l.b16 %v564
    %v604 = vunpack.c.l.b16 %v565
    %v605 = vunpack.c.l.b16 %v566
    %v606 = vunpack.c.l.b16 %v567
    %v607 = vpack.c.b16 %v592, %v591
    %v608 = vpack.c.b16 %v594, %v593
    %v609 = vpack.c.b16 %v596, %v595
    %v610 = vpack.c.b16 %v598, %v597
    %v611 = vpack.c.b16 %v600, %v599
    %v612 = vpack.c.b16 %v602, %v601
    %v613 = vpack.c.b16 %v604, %v603
    %v614 = vpack.c.b16 %v606, %v605
    %623 = vmatprep.subr.bf16.mxu0 0
    %624 = vmatpush1.bf16.msra.mxu0 %v607
    %625 = vmatprep.subr.bf16.mxu0 0
    %626 = vmatpush1.bf16.msra.mxu0 %v608
    %627 = vmatprep.subr.bf16.mxu0 0
    %628 = vmatpush1.bf16.msra.mxu0 %v609
    %629 = vmatprep.subr.bf16.mxu0 0
    %630 = vmatpush1.bf16.msra.mxu0 %v610
    %631 = vmatprep.subr.bf16.mxu0 0
    %632 = vmatpush1.bf16.msra.mxu0 %v611
    %633 = vmatprep.subr.bf16.mxu0 0
    %634 = vmatpush1.bf16.msra.mxu0 %v612
    %635 = vmatprep.subr.bf16.mxu0 0
    %636 = vmatpush1.bf16.msra.mxu0 %v613
    %637 = vmatprep.subr.bf16.mxu0 0
    %638 = vmatpush1.bf16.msra.mxu0 %v614
    %639 = vmatprep.subr.bf16.mxu0 0
    %640 = vmatpush1.bf16.msra.mxu0 0
    %641 = vmatprep.subr.bf16.mxu0 0
    %642 = vmatpush1.bf16.msra.mxu0 0
    %643 = vmatprep.subr.bf16.mxu0 0
    %644 = vmatpush1.bf16.msra.mxu0 0
    %645 = vmatprep.subr.bf16.mxu0 0
    %646 = vmatpush1.bf16.msra.mxu0 0
    %647 = vmatprep.subr.bf16.mxu0 0
    %648 = vmatpush1.bf16.msra.mxu0 0
    %649 = vmatprep.subr.bf16.mxu0 0
    %650 = vmatpush1.bf16.msra.mxu0 0
    %651 = vmatprep.subr.bf16.mxu0 0
    %652 = vmatpush1.bf16.msra.mxu0 0
    %653 = vmatprep.subr.bf16.mxu0 0
    %654 = vmatpush1.bf16.msra.mxu0 0
    %655 = vmatprep.mubr.bf16.mxu0 0
    %656 = vmatmul.mubr.bf16.gmra.mrb[0].mxu0 %v551
    %v657 = vpop.f32.mrb[0].mxu0
    %v658 = vadd.f32 %v573, %v657
    %v659 = vpop.f32.mrb[0].mxu0
    %v660 = vpop.f32.mrb[0].mxu0
    %v661 = vpop.f32.mrb[0].mxu0
    %662 = vdwg.mxu0
    %663 = vst [vmem:[#allocation7] sm:$0xff] %v658
    // Predicated region
    $region34: #{tpu_custom_call.1} parent=1 // pred_check
      _
    $region35: #{tpu_custom_call.1} parent=1 // pred_check_branch
      %665 = sbr.rel (0) target = $region37
    $region36: #{tpu_custom_call.1} parent=1 // pred_region
      %s667 = ssub.s32 128, 128
      %668 = vsyncadd [#allocation4], %s667
      %s670 = sshll.u32 [#allocation7], 4
      %s671 = int_to_ptr.vmem [resolvable:$true] %s670
      %673 = dma.vmem_to_hbm [thread:$0]  %s671, 128, %s6, [#allocation4]
    $region37: #{tpu_custom_call.1} parent=1 // pred_fallthru
      _
    // Predicated region
    $region38: #{tpu_custom_call.1} parent=1 // pred_check
      _
    $region39: #{tpu_custom_call.1} parent=1 // pred_check_branch
      %675 = sbr.rel (0) target = $region41
    $region40: #{tpu_custom_call.1} parent=1 // pred_region
      %676 = dma.done [#allocation4], 128
    $region41: #{tpu_custom_call.1} parent=1 // pred_fallthru
      _
    %677 = vsyncpa [#allocation3], 1
    %678 = vsyncpa [#allocation6], 1
    %679 = vsyncpa [#allocation4], 1

</llo_original>
